<compile_context>
chip_gen: v7x
topology: tpu7x:2x2x1
jax: 0.10.0
libtpu: 0.0.40
codegen_flags: <defaults>
</compile_context>

<pallas_src>
import functools

import jax
import jax.numpy as jnp
from jax.experimental import pallas as pl
from jax.experimental.pallas import tpu as pltpu


def _focal_block_kernel(logits_ref, tgt_ref, loss_ref, corr_ref, *,
                        num_classes, gamma, valid_positions, block_positions):
    # logits_ref: (1, C, sub_tiles, 128) native dtype
    # tgt_ref   : (1, sub_tiles, 128) int32
    # loss_ref, corr_ref: (1, 1, 8, 128) f32 lane-dense per-block partials
    C = num_classes
    tgt = tgt_ref[0]                                        # (sub_tiles, 128)

    # Global flattened-position index of every element in this block (to mask
    # the padded tail of the position axis).
    sub = jax.lax.broadcasted_iota(jnp.int32, tgt.shape, 0)
    lane = jax.lax.broadcasted_iota(jnp.int32, tgt.shape, 1)
    pos = pl.program_id(1) * block_positions + sub * 128 + lane
    valid = pos < valid_positions

    # Running max over the small, static class axis — pure VPU work.
    m = logits_ref[0, 0].astype(jnp.float32)
    for c in range(1, C):
        m = jnp.maximum(m, logits_ref[0, c].astype(jnp.float32))

    sum_exp = jnp.zeros_like(m)
    shifted_t = jnp.zeros_like(m)                           # (x_target - max)
    first_max = jnp.full(tgt.shape, C, jnp.int32)           # first-occurrence argmax
    for c in range(C):
        sh = logits_ref[0, c].astype(jnp.float32) - m
        sum_exp = sum_exp + jnp.exp(sh)
        shifted_t = jnp.where(tgt == c, sh, shifted_t)
        first_max = jnp.where((sh == 0.0) & (first_max == C), c, first_max)

    logpt = shifted_t - jnp.log(sum_exp)                    # log p_target
    one_minus_pt = 1.0 - jnp.exp(logpt)

    g = float(gamma)
    if g.is_integer() and g >= 0:
        w = jnp.ones_like(one_minus_pt)
        for _ in range(int(g)):                             # gamma=1 -> one multiply
            w = w * one_minus_pt
    else:
        w = one_minus_pt ** g                               # non-integer gamma fallback
    per_sample = jnp.where(valid, -(w * logpt), 0.0)
    correct = jnp.where(valid & (first_max == tgt), 1.0, 0.0)

    # Reduce only over sublanes; keep (1,128) lane partials and splat across the
    # 8 output sublanes (unmasked dense store).  Final sum happens in the wrapper.
    loss_lanes = jnp.sum(per_sample, axis=0, keepdims=True)   # (1, 128)
    corr_lanes = jnp.sum(correct, axis=0, keepdims=True)      # (1, 128)
    loss_ref[...] = jnp.broadcast_to(loss_lanes, loss_ref.shape)
    corr_ref[...] = jnp.broadcast_to(corr_lanes, corr_ref.shape)


def loss_forward(pred, ref, reduction="mean", gamma=1):
    """pred: dict with 'prediction' -> logits (N, C) or (N, C, *spatial) [NCHW].
    ref: labels (N, 1) or (N, 1, *spatial). Returns (loss, acc) like the torch module."""
    logits = pred["prediction"]
    labels = jnp.squeeze(ref, axis=1)
    n_batch = ref.shape[0]
    C = logits.shape[1]

    if logits.ndim > 2:
        B = logits.shape[0]
        S = 1
        for d in logits.shape[2:]:
            S *= d
        logits3 = logits.reshape(B, C, S)          # no NCHW -> NHWC transpose needed
        labels2 = labels.reshape(B, S)
    else:
        B, S = 1, logits.shape[0]                  # (N, C): classes stay non-minor
        logits3 = jnp.transpose(logits, (1, 0)).reshape(1, C, S)
        labels2 = labels.reshape(1, S)
    labels2 = labels2.astype(jnp.int32)

    itemsize = int(jnp.dtype(logits.dtype).itemsize)
    total_sub = -(-S // 128)                       # ceil(S / 128) 128-lane sub-tiles
    budget = 1 << 20                               # ~1 MiB logits block (x2 buffers)
    sub_budget = max(8, (budget // (C * itemsize * 128)) // 8 * 8)
    if total_sub <= sub_budget:
        sub_tiles, n_s = total_sub, 1              # single block: full-extent allowed
    else:
        sub_tiles = sub_budget                     # multiple of 8 -> legal tiled block
        n_s = -(-total_sub // sub_tiles)
    s_pad = n_s * sub_tiles * 128
    if s_pad != S:
        logits3 = jnp.pad(logits3, ((0, 0), (0, 0), (0, s_pad - S)))
        labels2 = jnp.pad(labels2, ((0, 0), (0, s_pad - S)))
    logits4 = logits3.reshape(B, C, s_pad // 128, 128)
    labels3 = labels2.reshape(B, s_pad // 128, 128)
    block_positions = sub_tiles * 128

    kernel = functools.partial(
        _focal_block_kernel,
        num_classes=C,
        gamma=float(gamma),
        valid_positions=S,
        block_positions=block_positions,
    )

    loss_part, corr_part = pl.pallas_call(
        kernel,
        out_shape=(
            jax.ShapeDtypeStruct((B, n_s, 8, 128), jnp.float32),
            jax.ShapeDtypeStruct((B, n_s, 8, 128), jnp.float32),
        ),
        grid_spec=pltpu.PrefetchScalarGridSpec(
            num_scalar_prefetch=0,
            grid=(B, n_s),
            in_specs=[
                pl.BlockSpec((1, C, sub_tiles, 128), lambda b, s: (b, 0, s, 0)),
                pl.BlockSpec((1, sub_tiles, 128), lambda b, s: (b, s, 0)),
            ],
            out_specs=(
                pl.BlockSpec((1, 1, 8, 128), lambda b, s: (b, s, 0, 0)),
                pl.BlockSpec((1, 1, 8, 128), lambda b, s: (b, s, 0, 0)),
            ),
        ),
        compiler_params=pltpu.CompilerParams(
            dimension_semantics=("parallel", "parallel"),
            vmem_limit_bytes=32 * 1024 * 1024,
        ),
        cost_estimate=pl.CostEstimate(
            flops=int(B * S * (6 * C + 12)),
            transcendentals=int(B * S * (C + 2)),
            bytes_accessed=int(B * s_pad * (C * itemsize + 4)
                               + 2 * B * n_s * 8 * 128 * 4),
        ),
    )(logits4, labels3)

    loss_sum = jnp.sum(loss_part[:, :, 0, :])
    corr_sum = jnp.sum(corr_part[:, :, 0, :])
    m_rows = B * S
    loss = loss_sum / m_rows if reduction == "mean" else loss_sum
    # NOTE: matches the PyTorch module exactly — divides by batch N, not by the
    # number of flattened elements, so 'acc' can exceed 1 for spatial inputs.
    acc = corr_sum / n_batch
    return loss, acc


def _reference_loss(logits, ref, reduction="mean", gamma=1.0):
    """Pure-JAX replica of the torch FocalLoss(gamma) + accuracy math."""
    C = logits.shape[1]
    labels = jnp.squeeze(ref, axis=1)
    if logits.ndim > 2:
        perm = (0,) + tuple(range(2, logits.ndim)) + (1,)
        flat_logits = jnp.transpose(logits, perm).reshape(-1, C)
    else:
        flat_logits = logits
    flat_labels = labels.reshape(-1, 1).astype(jnp.int32)
    logp = jax.nn.log_softmax(flat_logits.astype(jnp.float32), axis=-1)
    logpt = jnp.take_along_axis(logp, flat_labels, axis=-1)[:, 0]
    pt = jnp.exp(logpt)
    per = -((1.0 - pt) ** gamma) * logpt
    loss = jnp.mean(per) if reduction == "mean" else jnp.sum(per)
    acc = jnp.sum(jnp.argmax(logits, axis=1) == labels).astype(jnp.float32) / ref.shape[0]
    return loss, acc


if __name__ == "__main__":
    key = jax.random.PRNGKey(0)
    k1, k2, k3, k4, k5, k6 = jax.random.split(key, 6)

    def check(logits, ref_labels, reduction="mean", tol=1e-5):
        got_loss, got_acc = loss_forward({"prediction": logits}, ref_labels, reduction)
        jax.block_until_ready((got_loss, got_acc))
        want_loss, want_acc = _reference_loss(logits, ref_labels, reduction)
        assert jnp.allclose(got_loss, want_loss, rtol=tol, atol=tol), (got_loss, want_loss)
        assert jnp.allclose(got_acc, want_acc, rtol=tol, atol=tol), (got_acc, want_acc)

    # 1) segmentation-style NCHW logits, float32, mean reduction
    N, C, H, W = 2, 4, 16, 16
    logits = jax.random.normal(k1, (N, C, H, W), dtype=jnp.float32)
    ref = jax.random.randint(k2, (N, 1, H, W), 0, C).astype(jnp.int32)
    check(logits, ref)

    # 2) odd spatial size (exercises the position-padding mask), bf16 logits
    Ho, Wo = 9, 9
    logits_o = jax.random.normal(k3, (N, C, Ho, Wo), dtype=jnp.float32).astype(jnp.bfloat16)
    ref_o = jax.random.randint(k4, (N, 1, Ho, Wo), 0, C).astype(jnp.int32)
    check(logits_o, ref_o, tol=1e-4)

    # 3) plain (N, C) classification logits, 'sum' reduction
    Nc = 8
    logits_c = jax.random.normal(k5, (Nc, C), dtype=jnp.float32)
    ref_c = jax.random.randint(k6, (Nc, 1), 0, C).astype(jnp.int32)
    check(logits_c, ref_c, reduction="sum")

    print("KERNEL_OK")
</pallas_src>

<mosaic_0001>
module attributes {stable_mosaic.version = 11 : i64} {
  func.func @_focal_block_kernel(%arg0: i32, %arg1: i32, %arg2: memref<1x4x2x128xf32, #tpu.memory_space<vmem>>, %arg3: memref<1x2x128xi32, #tpu.memory_space<vmem>>, %arg4: memref<1x1x8x128xf32, #tpu.memory_space<vmem>>, %arg5: memref<1x1x8x128xf32, #tpu.memory_space<vmem>>) attributes {dimension_semantics = [#tpu.dimension_semantics<parallel>, #tpu.dimension_semantics<parallel>], iteration_bounds = array<i64: 2, 1>, scalar_prefetch = 0 : i64, scratch_operands = 0 : i64, tpu.core_type = #tpu.core_type<tc>, window_params = [{transform_indices = @transform_0, window_bounds = array<i64: 1, 4, 2, 128>}, {transform_indices = @transform_1, window_bounds = array<i64: 1, 2, 128>}, {transform_indices = @transform_2, window_bounds = array<i64: 1, 1, 8, 128>}, {transform_indices = @transform_3, window_bounds = array<i64: 1, 1, 8, 128>}]} {
    %c0 = arith.constant 0 : index
    %c0_0 = arith.constant 0 : index
    %c0_1 = arith.constant 0 : index
    %0 = vector.load %arg3[%c0, %c0_0, %c0_1] : memref<1x2x128xi32, #tpu.memory_space<vmem>>, vector<1x2x128xi32>
    %1 = vector.shape_cast %0 : vector<1x2x128xi32> to vector<2x128xi32>
    %2 = tpu.iota {dimensions = array<i32: 0>} : vector<2x128xi32>
    %3 = tpu.iota {dimensions = array<i32: 1>} : vector<2x128xi32>
    %c256_i32 = arith.constant 256 : i32
    %4 = arith.muli %arg1, %c256_i32 : i32
    %c128_i32 = arith.constant 128 : i32
    %5 = vector.broadcast %c128_i32 : i32 to vector<2x128xi32>
    %6 = arith.muli %2, %5 : vector<2x128xi32>
    %7 = vector.broadcast %4 : i32 to vector<2x128xi32>
    %8 = arith.addi %7, %6 : vector<2x128xi32>
    %9 = arith.addi %8, %3 : vector<2x128xi32>
    %c256_i32_2 = arith.constant 256 : i32
    %10 = vector.broadcast %c256_i32_2 : i32 to vector<2x128xi32>
    %11 = arith.cmpi slt, %9, %10 : vector<2x128xi32>
    %c0_3 = arith.constant 0 : index
    %c0_4 = arith.constant 0 : index
    %c0_5 = arith.constant 0 : index
    %c0_6 = arith.constant 0 : index
    %12 = vector.load %arg2[%c0_3, %c0_4, %c0_5, %c0_6] : memref<1x4x2x128xf32, #tpu.memory_space<vmem>>, vector<1x1x2x128xf32>
    %13 = vector.shape_cast %12 : vector<1x1x2x128xf32> to vector<2x128xf32>
    %c0_7 = arith.constant 0 : index
    %c1 = arith.constant 1 : index
    %c0_8 = arith.constant 0 : index
    %c0_9 = arith.constant 0 : index
    %14 = vector.load %arg2[%c0_7, %c1, %c0_8, %c0_9] : memref<1x4x2x128xf32, #tpu.memory_space<vmem>>, vector<1x1x2x128xf32>
    %15 = vector.shape_cast %14 : vector<1x1x2x128xf32> to vector<2x128xf32>
    %16 = arith.maximumf %13, %15 : vector<2x128xf32>
    %c0_10 = arith.constant 0 : index
    %c2 = arith.constant 2 : index
    %c0_11 = arith.constant 0 : index
    %c0_12 = arith.constant 0 : index
    %17 = vector.load %arg2[%c0_10, %c2, %c0_11, %c0_12] : memref<1x4x2x128xf32, #tpu.memory_space<vmem>>, vector<1x1x2x128xf32>
    %18 = vector.shape_cast %17 : vector<1x1x2x128xf32> to vector<2x128xf32>
    %19 = arith.maximumf %16, %18 : vector<2x128xf32>
    %c0_13 = arith.constant 0 : index
    %c3 = arith.constant 3 : index
    %c0_14 = arith.constant 0 : index
    %c0_15 = arith.constant 0 : index
    %20 = vector.load %arg2[%c0_13, %c3, %c0_14, %c0_15] : memref<1x4x2x128xf32, #tpu.memory_space<vmem>>, vector<1x1x2x128xf32>
    %21 = vector.shape_cast %20 : vector<1x1x2x128xf32> to vector<2x128xf32>
    %22 = arith.maximumf %19, %21 : vector<2x128xf32>
    %cst = arith.constant 0.000000e+00 : f32
    %23 = vector.broadcast %cst : f32 to vector<2x128xf32>
    %cst_16 = arith.constant 0.000000e+00 : f32
    %24 = vector.broadcast %cst_16 : f32 to vector<2x128xf32>
    %c4_i32 = arith.constant 4 : i32
    %25 = vector.broadcast %c4_i32 : i32 to vector<2x128xi32>
    %c0_17 = arith.constant 0 : index
    %c0_18 = arith.constant 0 : index
    %c0_19 = arith.constant 0 : index
    %c0_20 = arith.constant 0 : index
    %26 = vector.load %arg2[%c0_17, %c0_18, %c0_19, %c0_20] : memref<1x4x2x128xf32, #tpu.memory_space<vmem>>, vector<1x1x2x128xf32>
    %27 = vector.shape_cast %26 : vector<1x1x2x128xf32> to vector<2x128xf32>
    %28 = arith.subf %27, %22 : vector<2x128xf32>
    %29 = math.exp %28 : vector<2x128xf32>
    %30 = arith.addf %23, %29 : vector<2x128xf32>
    %c0_i32 = arith.constant 0 : i32
    %31 = vector.broadcast %c0_i32 : i32 to vector<2x128xi32>
    %32 = arith.cmpi eq, %1, %31 : vector<2x128xi32>
    %33 = arith.select %32, %28, %24 : vector<2x128xi1>, vector<2x128xf32>
    %cst_21 = arith.constant 0.000000e+00 : f32
    %34 = vector.broadcast %cst_21 : f32 to vector<2x128xf32>
    %35 = arith.cmpf oeq, %28, %34 : vector<2x128xf32>
    %c4_i32_22 = arith.constant 4 : i32
    %36 = vector.broadcast %c4_i32_22 : i32 to vector<2x128xi32>
    %37 = arith.cmpi eq, %25, %36 : vector<2x128xi32>
    %38 = arith.andi %35, %37 : vector<2x128xi1>
    %c0_i32_23 = arith.constant 0 : i32
    %39 = vector.broadcast %c0_i32_23 : i32 to vector<2x128xi32>
    %40 = arith.select %38, %39, %25 : vector<2x128xi1>, vector<2x128xi32>
    %c0_24 = arith.constant 0 : index
    %c1_25 = arith.constant 1 : index
    %c0_26 = arith.constant 0 : index
    %c0_27 = arith.constant 0 : index
    %41 = vector.load %arg2[%c0_24, %c1_25, %c0_26, %c0_27] : memref<1x4x2x128xf32, #tpu.memory_space<vmem>>, vector<1x1x2x128xf32>
    %42 = vector.shape_cast %41 : vector<1x1x2x128xf32> to vector<2x128xf32>
    %43 = arith.subf %42, %22 : vector<2x128xf32>
    %44 = math.exp %43 : vector<2x128xf32>
    %45 = arith.addf %30, %44 : vector<2x128xf32>
    %c1_i32 = arith.constant 1 : i32
    %46 = vector.broadcast %c1_i32 : i32 to vector<2x128xi32>
    %47 = arith.cmpi eq, %1, %46 : vector<2x128xi32>
    %48 = arith.select %47, %43, %33 : vector<2x128xi1>, vector<2x128xf32>
    %cst_28 = arith.constant 0.000000e+00 : f32
    %49 = vector.broadcast %cst_28 : f32 to vector<2x128xf32>
    %50 = arith.cmpf oeq, %43, %49 : vector<2x128xf32>
    %c4_i32_29 = arith.constant 4 : i32
    %51 = vector.broadcast %c4_i32_29 : i32 to vector<2x128xi32>
    %52 = arith.cmpi eq, %40, %51 : vector<2x128xi32>
    %53 = arith.andi %50, %52 : vector<2x128xi1>
    %c1_i32_30 = arith.constant 1 : i32
    %54 = vector.broadcast %c1_i32_30 : i32 to vector<2x128xi32>
    %55 = arith.select %53, %54, %40 : vector<2x128xi1>, vector<2x128xi32>
    %c0_31 = arith.constant 0 : index
    %c2_32 = arith.constant 2 : index
    %c0_33 = arith.constant 0 : index
    %c0_34 = arith.constant 0 : index
    %56 = vector.load %arg2[%c0_31, %c2_32, %c0_33, %c0_34] : memref<1x4x2x128xf32, #tpu.memory_space<vmem>>, vector<1x1x2x128xf32>
    %57 = vector.shape_cast %56 : vector<1x1x2x128xf32> to vector<2x128xf32>
    %58 = arith.subf %57, %22 : vector<2x128xf32>
    %59 = math.exp %58 : vector<2x128xf32>
    %60 = arith.addf %45, %59 : vector<2x128xf32>
    %c2_i32 = arith.constant 2 : i32
    %61 = vector.broadcast %c2_i32 : i32 to vector<2x128xi32>
    %62 = arith.cmpi eq, %1, %61 : vector<2x128xi32>
    %63 = arith.select %62, %58, %48 : vector<2x128xi1>, vector<2x128xf32>
    %cst_35 = arith.constant 0.000000e+00 : f32
    %64 = vector.broadcast %cst_35 : f32 to vector<2x128xf32>
    %65 = arith.cmpf oeq, %58, %64 : vector<2x128xf32>
    %c4_i32_36 = arith.constant 4 : i32
    %66 = vector.broadcast %c4_i32_36 : i32 to vector<2x128xi32>
    %67 = arith.cmpi eq, %55, %66 : vector<2x128xi32>
    %68 = arith.andi %65, %67 : vector<2x128xi1>
    %c2_i32_37 = arith.constant 2 : i32
    %69 = vector.broadcast %c2_i32_37 : i32 to vector<2x128xi32>
    %70 = arith.select %68, %69, %55 : vector<2x128xi1>, vector<2x128xi32>
    %c0_38 = arith.constant 0 : index
    %c3_39 = arith.constant 3 : index
    %c0_40 = arith.constant 0 : index
    %c0_41 = arith.constant 0 : index
    %71 = vector.load %arg2[%c0_38, %c3_39, %c0_40, %c0_41] : memref<1x4x2x128xf32, #tpu.memory_space<vmem>>, vector<1x1x2x128xf32>
    %72 = vector.shape_cast %71 : vector<1x1x2x128xf32> to vector<2x128xf32>
    %73 = arith.subf %72, %22 : vector<2x128xf32>
    %74 = math.exp %73 : vector<2x128xf32>
    %75 = arith.addf %60, %74 : vector<2x128xf32>
    %c3_i32 = arith.constant 3 : i32
    %76 = vector.broadcast %c3_i32 : i32 to vector<2x128xi32>
    %77 = arith.cmpi eq, %1, %76 : vector<2x128xi32>
    %78 = arith.select %77, %73, %63 : vector<2x128xi1>, vector<2x128xf32>
    %cst_42 = arith.constant 0.000000e+00 : f32
    %79 = vector.broadcast %cst_42 : f32 to vector<2x128xf32>
    %80 = arith.cmpf oeq, %73, %79 : vector<2x128xf32>
    %c4_i32_43 = arith.constant 4 : i32
    %81 = vector.broadcast %c4_i32_43 : i32 to vector<2x128xi32>
    %82 = arith.cmpi eq, %70, %81 : vector<2x128xi32>
    %83 = arith.andi %80, %82 : vector<2x128xi1>
    %c3_i32_44 = arith.constant 3 : i32
    %84 = vector.broadcast %c3_i32_44 : i32 to vector<2x128xi32>
    %85 = arith.select %83, %84, %70 : vector<2x128xi1>, vector<2x128xi32>
    %86 = math.log %75 : vector<2x128xf32>
    %87 = arith.subf %78, %86 : vector<2x128xf32>
    %88 = math.exp %87 : vector<2x128xf32>
    %cst_45 = arith.constant 1.000000e+00 : f32
    %89 = vector.broadcast %cst_45 : f32 to vector<2x128xf32>
    %90 = arith.subf %89, %88 : vector<2x128xf32>
    %cst_46 = arith.constant 1.000000e+00 : f32
    %91 = vector.broadcast %cst_46 : f32 to vector<2x128xf32>
    %92 = arith.mulf %91, %90 : vector<2x128xf32>
    %93 = arith.mulf %92, %87 : vector<2x128xf32>
    %cst_47 = arith.constant 0.000000e+00 : f32
    %94 = vector.broadcast %cst_47 : f32 to vector<2x128xf32>
    %95 = arith.subf %94, %93 : vector<2x128xf32>
    %cst_48 = arith.constant 0.000000e+00 : f32
    %96 = vector.broadcast %cst_48 : f32 to vector<2x128xf32>
    %97 = arith.select %11, %95, %96 : vector<2x128xi1>, vector<2x128xf32>
    %98 = arith.cmpi eq, %85, %1 : vector<2x128xi32>
    %99 = arith.andi %11, %98 : vector<2x128xi1>
    %cst_49 = arith.constant 1.000000e+00 : f32
    %cst_50 = arith.constant 0.000000e+00 : f32
    %100 = vector.broadcast %cst_49 : f32 to vector<2x128xf32>
    %101 = vector.broadcast %cst_50 : f32 to vector<2x128xf32>
    %102 = arith.select %99, %100, %101 : vector<2x128xi1>, vector<2x128xf32>
    %cst_51 = arith.constant dense<0.000000e+00> : vector<128xf32>
    %103 = vector.multi_reduction <add>, %97, %cst_51 [0] : vector<2x128xf32> to vector<128xf32>
    %104 = vector.shape_cast %103 : vector<128xf32> to vector<1x128xf32>
    %cst_52 = arith.constant dense<0.000000e+00> : vector<128xf32>
    %105 = vector.multi_reduction <add>, %102, %cst_52 [0] : vector<2x128xf32> to vector<128xf32>
    %106 = vector.shape_cast %105 : vector<128xf32> to vector<1x128xf32>
    %107 = vector.shape_cast %104 : vector<1x128xf32> to vector<1x1x1x128xf32>
    %108 = vector.broadcast %107 : vector<1x1x1x128xf32> to vector<1x1x8x128xf32>
    %c0_53 = arith.constant 0 : index
    %c0_54 = arith.constant 0 : index
    %c0_55 = arith.constant 0 : index
    %c0_56 = arith.constant 0 : index
    %109 = vector.load %arg4[%c0_53, %c0_54, %c0_55, %c0_56] : memref<1x1x8x128xf32, #tpu.memory_space<vmem>>, vector<1x1x8x128xf32>
    tpu.vector_store %arg4[%c0_53, %c0_54, %c0_55, %c0_56], %108 {strides = array<i32>} : memref<1x1x8x128xf32, #tpu.memory_space<vmem>>, vector<1x1x8x128xf32>,
    %110 = vector.shape_cast %106 : vector<1x128xf32> to vector<1x1x1x128xf32>
    %111 = vector.broadcast %110 : vector<1x1x1x128xf32> to vector<1x1x8x128xf32>
    %c0_57 = arith.constant 0 : index
    %c0_58 = arith.constant 0 : index
    %c0_59 = arith.constant 0 : index
    %c0_60 = arith.constant 0 : index
    %112 = vector.load %arg5[%c0_57, %c0_58, %c0_59, %c0_60] : memref<1x1x8x128xf32, #tpu.memory_space<vmem>>, vector<1x1x8x128xf32>
    tpu.vector_store %arg5[%c0_57, %c0_58, %c0_59, %c0_60], %111 {strides = array<i32>} : memref<1x1x8x128xf32, #tpu.memory_space<vmem>>, vector<1x1x8x128xf32>,
    return
  }
  func.func @transform_0(%arg0: i32, %arg1: i32) -> (i32, i32, i32, i32) {
    %c0_i32 = arith.constant 0 : i32
    %c0_i32_0 = arith.constant 0 : i32
    %c0_i32_1 = arith.constant 0 : i32
    return %arg0, %c0_i32, %arg1, %c0_i32_0 : i32, i32, i32, i32
  }
  func.func @transform_1(%arg0: i32, %arg1: i32) -> (i32, i32, i32) {
    %c0_i32 = arith.constant 0 : i32
    %c0_i32_0 = arith.constant 0 : i32
    return %arg0, %arg1, %c0_i32 : i32, i32, i32
  }
  func.func @transform_2(%arg0: i32, %arg1: i32) -> (i32, i32, i32, i32) {
    %c0_i32 = arith.constant 0 : i32
    %c0_i32_0 = arith.constant 0 : i32
    %c0_i32_1 = arith.constant 0 : i32
    return %arg0, %arg1, %c0_i32, %c0_i32_0 : i32, i32, i32, i32
  }
  func.func @transform_3(%arg0: i32, %arg1: i32) -> (i32, i32, i32, i32) {
    %c0_i32 = arith.constant 0 : i32
    %c0_i32_0 = arith.constant 0 : i32
    %c0_i32_1 = arith.constant 0 : i32
    return %arg0, %arg1, %c0_i32, %c0_i32_0 : i32, i32, i32, i32
  }
}

</mosaic_0001>

<llo_original>
// kernel: tpu_custom_call.1
$region0: #{tpu_custom_call.1}
  #allocation0 [shape = 'u32[]', space=smem, size = 0x4, offset = 0x4, fixed_abs, tag = 'smem constant byte address 0x4 - core index']
  #allocation1 [shape = 'u32[144,128]{1,0:T(1,128)}', space=vmem, size = 0x12000, scoped, tag = 'internal scratch']
  %s0 = inlined_call_operand.hbm [shape: f32[2,4,2,128], index: 0, kind: input, shape index: {}]
  %s1 = inlined_call_operand.hbm [shape: s32[2,2,128], index: 1, kind: input, shape index: {}]
  %s2 = inlined_call_operand.hbm [shape: f32[2,1,8,128], index: 2, kind: output, shape index: {0}]
  %s3 = inlined_call_operand.hbm [shape: f32[2,1,8,128], index: 3, kind: output, shape index: {1}]
  %4 = xla_tuple %s2, %s3
  %s5 = sld [smem:[#allocation0]]
  $region57: #{tpu_custom_call.1} parent=0
    _
  %s7 = ssub.s32 1, %s5
  %s8 = scalar_select 0, %s7, %s5
  $region1: #{tpu_custom_call.1} parent=0
    #allocation2 [shape = 'u8[8192]{0}', space=vmem, size = 0x2000, scoped, tag = 'input window, operand 0']
    #allocation3 [shape = 's32[2]{0}', space=sflag, size = 0x8, scoped, tag = 'scoped memory for tpu_custom_call.1']
    #allocation4 [shape = 's32[2]{0}', space=sflag, size = 0x8, scoped, tag = 'scoped memory for tpu_custom_call.1']
    #allocation5 [shape = 'u8[2048]{0}', space=vmem, size = 0x800, scoped, tag = 'input window, operand 1']
    #allocation6 [shape = 's32[2]{0}', space=sflag, size = 0x8, scoped, tag = 'scoped memory for tpu_custom_call.1']
    #allocation7 [shape = 'u8[8192]{0}', space=vmem, size = 0x2000, scoped, tag = 'output window, operand 0']
    #allocation8 [shape = 'u8[8192]{0}', space=vmem, size = 0x2000, scoped, tag = 'output window, operand 1']
    #allocation9 [shape = 's32[2]{0}', space=sflag, size = 0x8, scoped, tag = 'scoped memory for tpu_custom_call.1']
    %9 = vsyncpa [#allocation3], 0
    %s10 = scalar_lea.sflag [#allocation3], 1
    %11 = vsyncpa %s10, 0
    %12 = vsyncpa [#allocation6], 0
    %s13 = scalar_lea.sflag [#allocation6], 1
    %14 = vsyncpa %s13, 0
    %15 = vsyncpa [#allocation4], 0
    %s16 = scalar_lea.sflag [#allocation4], 1
    %17 = vsyncpa %s16, 0
    %18 = vsyncpa [#allocation9], 0
    %s19 = scalar_lea.sflag [#allocation9], 1
    %20 = vsyncpa %s19, 0
    loop: start=0, step=1, limit=4
    $region2: #{tpu_custom_call.1} parent=1 // loop_pre_header
      _
    $region3: #{tpu_custom_call.1} parent=1 // loop_header
      %s22 = sphi 0, %s26
      %p23 = scmp.ge.s32.totalorder %s22, 4
      %s29 = sphi 0, %s41
      %s30 = sphi 0, %s37
      %s31 = sphi 0, %s29
      %s32 = sphi 0, %s30
      %s33 = sphi 0, %s31
      %s34 = sphi 0, %s32
      %s46 = sphi 0, %s48
      %s49 = sphi 0, %s46
      %s50 = sphi 0, %s49
      %s66 = sphi 0, %s50
      %s74 = sphi 0, %s76
      %s77 = sphi 0, %s74
      %s78 = sphi 0, %s77
      %s94 = sphi 0, %s78
      %s102 = sphi 0, %s104
      %s105 = sphi 0, %s102
      %s106 = sphi 0, %s105
      %s122 = sphi 0, %s106
      %s130 = sphi 0, %s132
      %s133 = sphi 0, %s130
      %s134 = sphi 0, %s133
      %s150 = sphi 0, %s134
    $region4: #{tpu_custom_call.1} parent=1 // loop_header_branch
      %25 = sbr.rel (%p23) target = $region8
    $region5: #{tpu_custom_call.1} parent=1 // loop_body
      %s27 = ssub.s32 %s22, 1
      %s28 = ssub.s32 %s22, 2
      %s35 = sadd.s32 1, %s30
      %p36 = scmp.ge.s32.totalorder %s35, 1
      %s37 = scalar_select %p36, 0, %s35
      %s38 = sadd.s32 1, %s29
      %s39 = scalar_select %p36, %s38, %s29
      %p40 = scmp.ge.s32.totalorder %s39, 2
      %s41 = scalar_select %p40, 0, %s39
      %s42 = ssub.s32 %s29, %s41
      %s43 = ssub.s32 %s30, %s37
      %s44 = sor.u32 %s42, %s43
      %p45 = scmp.eq.s32.totalorder %s44, 0
      %s47 = sadd.s32 %s46, 1
      %s48 = scalar_select %p45, %s46, %s47
      %p51 = pneg %p45
      %p52 = scmp.eq.s32.totalorder %s22, 1
      %p53 = por %p51, %p52
      %p54 = scmp.ne.s32.totalorder %s46, %s49
      %p55 = scmp.eq.s32.totalorder %s22, 0
      %p56 = por %p54, %p55
      %p57 = scmp.ne.s32.totalorder %s46, %s49
      %p58 = scmp.eq.s32.totalorder %s27, 1
      %p59 = por %p57, %p58
      %p60 = scmp.ne.s32.totalorder %s49, %s50
      %p61 = scmp.eq.s32.totalorder %s27, 0
      %p62 = por %p60, %p61
      %p63 = scmp.ne.s32.totalorder %s49, %s50
      %p64 = scmp.eq.s32.totalorder %s28, 1
      %p65 = por %p63, %p64
      %p67 = scmp.ne.s32.totalorder %s50, %s66
      %p68 = scmp.eq.s32.totalorder %s28, 0
      %p69 = por %p67, %p68
      %s70 = ssub.s32 %s29, %s41
      %s71 = ssub.s32 %s30, %s37
      %s72 = sor.u32 %s70, %s71
      %p73 = scmp.eq.s32.totalorder %s72, 0
      %s75 = sadd.s32 %s74, 1
      %s76 = scalar_select %p73, %s74, %s75
      %p79 = pneg %p73
      %p80 = scmp.eq.s32.totalorder %s22, 1
      %p81 = por %p79, %p80
      %p82 = scmp.ne.s32.totalorder %s74, %s77
      %p83 = scmp.eq.s32.totalorder %s22, 0
      %p84 = por %p82, %p83
      %p85 = scmp.ne.s32.totalorder %s74, %s77
      %p86 = scmp.eq.s32.totalorder %s27, 1
      %p87 = por %p85, %p86
      %p88 = scmp.ne.s32.totalorder %s77, %s78
      %p89 = scmp.eq.s32.totalorder %s27, 0
      %p90 = por %p88, %p89
      %p91 = scmp.ne.s32.totalorder %s77, %s78
      %p92 = scmp.eq.s32.totalorder %s28, 1
      %p93 = por %p91, %p92
      %p95 = scmp.ne.s32.totalorder %s78, %s94
      %p96 = scmp.eq.s32.totalorder %s28, 0
      %p97 = por %p95, %p96
      %s98 = ssub.s32 %s29, %s41
      %s99 = ssub.s32 %s30, %s37
      %s100 = sor.u32 %s98, %s99
      %p101 = scmp.eq.s32.totalorder %s100, 0
      %s103 = sadd.s32 %s102, 1
      %s104 = scalar_select %p101, %s102, %s103
      %p107 = pneg %p101
      %p108 = scmp.eq.s32.totalorder %s22, 1
      %p109 = por %p107, %p108
      %p110 = scmp.ne.s32.totalorder %s102, %s105
      %p111 = scmp.eq.s32.totalorder %s22, 0
      %p112 = por %p110, %p111
      %p113 = scmp.ne.s32.totalorder %s102, %s105
      %p114 = scmp.eq.s32.totalorder %s27, 1
      %p115 = por %p113, %p114
      %p116 = scmp.ne.s32.totalorder %s105, %s106
      %p117 = scmp.eq.s32.totalorder %s27, 0
      %p118 = por %p116, %p117
      %p119 = scmp.ne.s32.totalorder %s105, %s106
      %p120 = scmp.eq.s32.totalorder %s28, 1
      %p121 = por %p119, %p120
      %p123 = scmp.ne.s32.totalorder %s106, %s122
      %p124 = scmp.eq.s32.totalorder %s28, 0
      %p125 = por %p123, %p124
      %s126 = ssub.s32 %s29, %s41
      %s127 = ssub.s32 %s30, %s37
      %s128 = sor.u32 %s126, %s127
      %p129 = scmp.eq.s32.totalorder %s128, 0
      %s131 = sadd.s32 %s130, 1
      %s132 = scalar_select %p129, %s130, %s131
      %p135 = pneg %p129
      %p136 = scmp.eq.s32.totalorder %s22, 1
      %p137 = por %p135, %p136
      %p138 = scmp.ne.s32.totalorder %s130, %s133
      %p139 = scmp.eq.s32.totalorder %s22, 0
      %p140 = por %p138, %p139
      %p141 = scmp.ne.s32.totalorder %s130, %s133
      %p142 = scmp.eq.s32.totalorder %s27, 1
      %p143 = por %p141, %p142
      %p144 = scmp.ne.s32.totalorder %s133, %s134
      %p145 = scmp.eq.s32.totalorder %s27, 0
      %p146 = por %p144, %p145
      %p147 = scmp.ne.s32.totalorder %s133, %s134
      %p148 = scmp.eq.s32.totalorder %s28, 1
      %p149 = por %p147, %p148
      %p151 = scmp.ne.s32.totalorder %s134, %s150
      %p152 = scmp.eq.s32.totalorder %s28, 0
      %p153 = por %p151, %p152
      %p154 = scmp.le.s32.totalorder 1, %s22
      %p155 = scmp.lt.s32.totalorder %s22, 3
      %p156 = pnand %p154, %p155
      %p157 = pneg %p156
      // Predicated region
      $region9: #{tpu_custom_call.1} parent=5 // pred_check
        _
      $region10: #{tpu_custom_call.1} parent=5 // pred_check_branch
        %159 = sbr.rel (%p156) target = $region12
      $region11: #{tpu_custom_call.1} parent=5 // pred_region
        %s160 = ssub.s32 %s22, 1
      $region12: #{tpu_custom_call.1} parent=5 // pred_fallthru
        _
      %p161 = scmp.lt.s32.totalorder %s22, 2
      // Predicated region
      $region13: #{tpu_custom_call.1} parent=5 // pred_check
        %p162 = pneg %p161
      $region14: #{tpu_custom_call.1} parent=5 // pred_check_branch
        %164 = sbr.rel (%p162) target = $region16
      $region15: #{tpu_custom_call.1} parent=5 // pred_region
        // Predicated region
        $region17: #{tpu_custom_call.1} parent=15 // pred_check
          %p165 = pneg %p56
        $region18: #{tpu_custom_call.1} parent=15 // pred_check_branch
          %167 = sbr.rel (%p165) target = $region20
        $region19: #{tpu_custom_call.1} parent=15 // pred_region
          %s168 = sand.u32 %s46, 1
          %s169 = scalar_lea.sflag [#allocation3], %s168
          %s170 = sand.u32 %s46, 1
          %s171 = smul.addr %s170, 8
          %s172 = scalar_lea.vmem [#allocation2], %s171
          %s174 = ssub.s32 128, 128
          %175 = vsyncadd %s169, %s174
          %s176 = smul.addr %s29, 4
          %s177 = sadd.s32 %s30, %s176
          %s178 = smul.addr %s177, 32
          %s179 = scalar_lea.hbm %s0, %s178
          %s180 = sshll.u32 %s172, 4
          %s181 = int_to_ptr.vmem [resolvable:$true] %s180
          %186 = dma.hbm_to_vmem [thread:$0]  %s179, 128, %s181, %s169, 32, 32, 2
        $region20: #{tpu_custom_call.1} parent=15 // pred_fallthru
          _
        // Predicated region
        $region21: #{tpu_custom_call.1} parent=15 // pred_check
          %p187 = pneg %p84
        $region22: #{tpu_custom_call.1} parent=15 // pred_check_branch
          %189 = sbr.rel (%p187) target = $region24
        $region23: #{tpu_custom_call.1} parent=15 // pred_region
          %s190 = sand.u32 %s74, 1
          %s191 = scalar_lea.sflag [#allocation6], %s190
          %s192 = sand.u32 %s74, 1
          %s193 = smul.addr %s192, 2
          %s194 = scalar_lea.vmem [#allocation5], %s193
          %s196 = ssub.s32 32, 32
          %197 = vsyncadd %s191, %s196
          %s198 = sadd.s32 %s30, %s29
          %s199 = smul.addr %s198, 32
          %s200 = scalar_lea.hbm %s1, %s199
          %s202 = sshll.u32 %s194, 4
          %s203 = int_to_ptr.vmem [resolvable:$true] %s202
          %205 = dma.hbm_to_vmem [thread:$0]  %s200, 32, %s203, %s191
        $region24: #{tpu_custom_call.1} parent=15 // pred_fallthru
          _
      $region16: #{tpu_custom_call.1} parent=5 // pred_fallthru
        _
      %p206 = scmp.le.s32.totalorder 1, %s22
      %p207 = scmp.lt.s32.totalorder %s22, 3
      %p208 = pnand %p206, %p207
      %p209 = pneg %p208
      // Predicated region
      $region25: #{tpu_custom_call.1} parent=5 // pred_check
        _
      $region26: #{tpu_custom_call.1} parent=5 // pred_check_branch
        %211 = sbr.rel (%p208) target = $region28
      $region27: #{tpu_custom_call.1} parent=5 // pred_region
        %s212 = ssub.s32 %s22, 1
        %s213 = sand.u32 %s49, 1
        %s214 = scalar_lea.sflag [#allocation3], %s213
        %s215 = sand.u32 %s49, 1
        %s216 = smul.addr %s215, 8
        %s217 = scalar_lea.vmem [#allocation2], %s216
        // Predicated region
        $region29: #{tpu_custom_call.1} parent=27 // pred_check
          %p218 = pneg %p62
        $region30: #{tpu_custom_call.1} parent=27 // pred_check_branch
          %220 = sbr.rel (%p218) target = $region32
        $region31: #{tpu_custom_call.1} parent=27 // pred_region
          %221 = dma.done %s214, 128
        $region32: #{tpu_custom_call.1} parent=27 // pred_fallthru
          _
        %s222 = sand.u32 %s77, 1
        %s223 = scalar_lea.sflag [#allocation6], %s222
        %s224 = sand.u32 %s77, 1
        %s225 = smul.addr %s224, 2
        %s226 = scalar_lea.vmem [#allocation5], %s225
        // Predicated region
        $region33: #{tpu_custom_call.1} parent=27 // pred_check
          %p227 = pneg %p90
        $region34: #{tpu_custom_call.1} parent=27 // pred_check_branch
          %229 = sbr.rel (%p227) target = $region36
        $region35: #{tpu_custom_call.1} parent=27 // pred_region
          %230 = dma.done %s223, 32
        $region36: #{tpu_custom_call.1} parent=27 // pred_fallthru
          _
        %s231 = sand.u32 %s49, 1
        %s232 = scalar_lea.sflag [#allocation3], %s231
        %s233 = sand.u32 %s49, 1
        %s234 = smul.addr %s233, 8
        %s235 = scalar_lea.vmem [#allocation2], %s234
        %p236 = pneg %p62
        %p237 = pneg %p59
        %s238 = sand.u32 %s77, 1
        %s239 = scalar_lea.sflag [#allocation6], %s238
        %s240 = sand.u32 %s77, 1
        %s241 = smul.addr %s240, 2
        %s242 = scalar_lea.vmem [#allocation5], %s241
        %p243 = pneg %p90
        %p244 = pneg %p87
        %p245 = pneg %p118
        %p246 = pneg %p115
        %s247 = sand.u32 %s105, 1
        %s248 = scalar_lea.sflag [#allocation4], %s247
        %s249 = sand.u32 %s105, 1
        %s250 = smul.addr %s249, 8
        %s251 = scalar_lea.vmem [#allocation7], %s250
        %p252 = pneg %p146
        %p253 = pneg %p143
        %s254 = sand.u32 %s133, 1
        %s255 = scalar_lea.sflag [#allocation9], %s254
        %s256 = sand.u32 %s133, 1
        %s257 = smul.addr %s256, 8
        %s258 = scalar_lea.vmem [#allocation8], %s257
        %v259 = vld [vmem:[%s226] sm:$0x3]
        %v260 = vlaneseq
        %v261 = vshrl.u32 %v260, 7
        %v262 = vlaneseq
        %v263 = vand.u32 %v262, 127
        %s264 = smul.u32 %s32, 256
        %v265 = vmul.u32 %v261, 128
        %v266 = vstv %s264
        %v267 = vadd.s32 %v266, %v265
        %v268 = vadd.s32 %v267, %v263
        %vm269 = vcmp.lt.s32.totalorder %v268, 256
        %v270 = vld [vmem:[%s217] sm:$0x3]
        %s271 = scalar_lea.vmem %s217, 2 [#allocation2]
        %v272 = vld [vmem:[%s271] sm:$0x3]
        %v273 = vmax.f32 %v270, %v272
        %s274 = scalar_lea.vmem %s217, 4 [#allocation2]
        %v275 = vld [vmem:[%s274] sm:$0x3]
        %v276 = vmax.f32 %v273, %v275
        %s277 = scalar_lea.vmem %s217, 6 [#allocation2]
        %v278 = vld [vmem:[%s277] sm:$0x3]
        %v279 = vmax.f32 %v276, %v278
        %v280 = vsub.f32 %v270, %v279
        %v281 = vmul.f32 %v280, 1.442695
        %v282 = vpow.pop %v281
        %v283 = vadd.f32 %v282, 0.0
        %vm284 = vcmp.eq.s32.totalorder %v259, 0
        %v285 = vsel %vm284, %v280, 0.0
        %vm286 = vcmp.eq.f32.partialorder %v280, 0.0
        %v287 = vsel %vm286, 0, 4
        %v288 = vsub.f32 %v272, %v279
        %v289 = vmul.f32 %v288, 1.442695
        %v290 = vpow.pop %v289
        %v291 = vadd.f32 %v283, %v290
        %vm292 = vcmp.eq.s32.totalorder %v259, 1
        %v293 = vsel %vm292, %v288, %v285
        %vm294 = vcmp.eq.f32.partialorder %v288, 0.0
        %vm295 = vcmp.eq.s32.totalorder %v287, 4
        %vm296 = vmand %vm294, %vm295
        %v297 = vsel %vm296, 1, %v287
        %v298 = vsub.f32 %v275, %v279
        %v299 = vmul.f32 %v298, 1.442695
        %v300 = vpow.pop %v299
        %v301 = vadd.f32 %v291, %v300
        %vm302 = vcmp.eq.s32.totalorder %v259, 2
        %v303 = vsel %vm302, %v298, %v293
        %vm304 = vcmp.eq.f32.partialorder %v298, 0.0
        %vm305 = vcmp.eq.s32.totalorder %v297, 4
        %vm306 = vmand %vm304, %vm305
        %v307 = vsel %vm306, 2, %v297
        %v308 = vsub.f32 %v278, %v279
        %v309 = vmul.f32 %v308, 1.442695
        %v310 = vpow.pop %v309
        %v311 = vadd.f32 %v301, %v310
        %vm312 = vcmp.eq.s32.totalorder %v259, 3
        %v313 = vsel %vm312, %v308, %v303
        %vm314 = vcmp.eq.f32.partialorder %v308, 0.0
        %vm315 = vcmp.eq.s32.totalorder %v307, 4
        %vm316 = vmand %vm314, %vm315
        %v317 = vsel %vm316, 3, %v307
        %v318 = vlog2.pop %v311
        %v319 = vmul.f32 %v318, 0.6931472
        %v320 = vsub.f32 %v313, %v319
        %v321 = vmul.f32 %v320, 1.442695
        %v322 = vpow.pop %v321
        %v323 = vsub.f32 1.0, %v322
        %v324 = vmul.f32 %v323, %v320
        %v325 = vsub.f32 0.0, %v324
        %v326 = vsel %vm269, %v325, 0.0
        %vm327 = vcmp.eq.s32.totalorder %v317, %v259
        %vm328 = vmand %vm269, %vm327
        %v329 = vsel %vm328, 1.0, 0.0
        %vm330 = vcmask 1041408
        %v331 = vsel %vm330, %v326, 0.0
        %v332 = vrot.slane %v331, 4
        %v333 = vadd.f32 %v331, %v332
        %v334 = vrot.slane %v333, 2
        %v335 = vadd.f32 %v333, %v334
        %v336 = vrot.slane %v335, 1
        %v337 = vadd.f32 %v335, %v336
        %v338 = vsel %vm330, %v329, 0.0
        %v339 = vrot.slane %v338, 4
        %v340 = vadd.f32 %v338, %v339
        %v341 = vrot.slane %v340, 2
        %v342 = vadd.f32 %v340, %v341
        %v343 = vrot.slane %v342, 1
        %v344 = vadd.f32 %v342, %v343
        %345 = vst [vmem:[%s251] sm:$0xff] %v337
        %346 = vst [vmem:[%s258] sm:$0xff] %v344
        %s347 = sand.u32 %s105, 1
        %s348 = scalar_lea.sflag [#allocation4], %s347
        %s349 = sand.u32 %s105, 1
        %s350 = smul.addr %s349, 8
        %s351 = scalar_lea.vmem [#allocation7], %s350
        %s352 = sand.u32 %s133, 1
        %s353 = scalar_lea.sflag [#allocation9], %s352
        %s354 = sand.u32 %s133, 1
        %s355 = smul.addr %s354, 8
        %s356 = scalar_lea.vmem [#allocation8], %s355
        // Predicated region
        $region37: #{tpu_custom_call.1} parent=27 // pred_check
          %p357 = pneg %p115
        $region38: #{tpu_custom_call.1} parent=27 // pred_check_branch
          %359 = sbr.rel (%p357) target = $region40
        $region39: #{tpu_custom_call.1} parent=27 // pred_region
          %s361 = ssub.s32 128, 128
          %362 = vsyncadd %s348, %s361
          %s363 = sadd.s32 %s32, %s31
          %s364 = smul.addr %s363, 128
          %s365 = scalar_lea.hbm %s2, %s364
          %s367 = sshll.u32 %s351, 4
          %s368 = int_to_ptr.vmem [resolvable:$true] %s367
          %370 = dma.vmem_to_hbm [thread:$0]  %s368, 128, %s365, %s348
        $region40: #{tpu_custom_call.1} parent=27 // pred_fallthru
          _
        // Predicated region
        $region41: #{tpu_custom_call.1} parent=27 // pred_check
          %p371 = pneg %p143
        $region42: #{tpu_custom_call.1} parent=27 // pred_check_branch
          %373 = sbr.rel (%p371) target = $region44
        $region43: #{tpu_custom_call.1} parent=27 // pred_region
          %s375 = ssub.s32 128, 128
          %376 = vsyncadd %s353, %s375
          %s377 = sadd.s32 %s32, %s31
          %s378 = smul.addr %s377, 128
          %s379 = scalar_lea.hbm %s3, %s378
          %s381 = sshll.u32 %s356, 4
          %s382 = int_to_ptr.vmem [resolvable:$true] %s381
          %384 = dma.vmem_to_hbm [thread:$0]  %s382, 128, %s379, %s353
        $region44: #{tpu_custom_call.1} parent=27 // pred_fallthru
          _
      $region28: #{tpu_custom_call.1} parent=5 // pred_fallthru
        _
      %p385 = scmp.le.s32.totalorder 2, %s22
      // Predicated region
      $region45: #{tpu_custom_call.1} parent=5 // pred_check
        %p386 = pneg %p385
      $region46: #{tpu_custom_call.1} parent=5 // pred_check_branch
        %388 = sbr.rel (%p386) target = $region48
      $region47: #{tpu_custom_call.1} parent=5 // pred_region
        %s389 = ssub.s32 %s22, 2
        // Predicated region
        $region49: #{tpu_custom_call.1} parent=47 // pred_check
          %p390 = pneg %p121
        $region50: #{tpu_custom_call.1} parent=47 // pred_check_branch
          %392 = sbr.rel (%p390) target = $region52
        $region51: #{tpu_custom_call.1} parent=47 // pred_region
          %s393 = sand.u32 %s106, 1
          %s394 = scalar_lea.sflag [#allocation4], %s393
          %s395 = sand.u32 %s106, 1
          %s396 = smul.addr %s395, 8
          %s397 = scalar_lea.vmem [#allocation7], %s396
          %398 = dma.done %s394, 128
        $region52: #{tpu_custom_call.1} parent=47 // pred_fallthru
          _
        // Predicated region
        $region53: #{tpu_custom_call.1} parent=47 // pred_check
          %p399 = pneg %p149
        $region54: #{tpu_custom_call.1} parent=47 // pred_check_branch
          %401 = sbr.rel (%p399) target = $region56
        $region55: #{tpu_custom_call.1} parent=47 // pred_region
          %s402 = sand.u32 %s134, 1
          %s403 = scalar_lea.sflag [#allocation9], %s402
          %s404 = sand.u32 %s134, 1
          %s405 = smul.addr %s404, 8
          %s406 = scalar_lea.vmem [#allocation8], %s405
          %407 = dma.done %s403, 128
        $region56: #{tpu_custom_call.1} parent=47 // pred_fallthru
          _
      $region48: #{tpu_custom_call.1} parent=5 // pred_fallthru
        _
    $region6: #{tpu_custom_call.1} parent=1 // loop_footer
      %s26 = sadd.s32 1, %s22
    $region7: #{tpu_custom_call.1} parent=1 // loop_footer_branch
      %21 = sbr.rel target = $region3
    $region8: #{tpu_custom_call.1} parent=1 // loop_exit
      _
    %408 = vsyncpa [#allocation3], 1
    %s409 = scalar_lea.sflag [#allocation3], 1
    %410 = vsyncpa %s409, 1
    %411 = vsyncpa [#allocation6], 1
    %s412 = scalar_lea.sflag [#allocation6], 1
    %413 = vsyncpa %s412, 1
    %414 = vsyncpa [#allocation4], 1
    %s415 = scalar_lea.sflag [#allocation4], 1
    %416 = vsyncpa %s415, 1
    %417 = vsyncpa [#allocation9], 1
    %s418 = scalar_lea.sflag [#allocation9], 1
    %419 = vsyncpa %s418, 1

</llo_original>
